<compile_context>
chip_gen: v7x
topology: tpu7x:2x2x1
jax: 0.10.0
libtpu: 0.0.40
codegen_flags: <defaults>
</compile_context>

<pallas_src>
import functools

import jax
import jax.numpy as jnp
from jax.experimental import pallas as pl
from jax.experimental.pallas import tpu as pltpu

_VMEM_LIMIT = 32 * 1024 * 1024          # explicit scoped-VMEM limit (v5e default is 16 MiB)
_K_TILE_BUDGET = 6 * 1024 * 1024        # bytes per in-buffer for the x+w K-dependent tiles


def _rup(x, m):
    return (x + m - 1) // m * m


def _pick_tile(padded_dim, candidates):
    for c in candidates:
        if padded_dim % c == 0:
            return c
    return padded_dim


def _largest_div_tile(dim, cap):
    """Largest multiple-of-128 divisor of `dim` (itself a 128-multiple) that is <= cap."""
    t = min(dim, max(128, cap // 128 * 128))
    while dim % t:
        t -= 128
    return t


# ----------------------------------------------------------------------------
# Pallas matmul kernel: bf16 MXU, f32 accumulator, fused bias/residual/act
# ----------------------------------------------------------------------------
def _mm_kernel(x_ref, w_ref, b_ref, *rest, act, has_res):
    if has_res:
        r_ref, o_ref, acc_ref = rest
    else:
        r_ref = None
        o_ref, acc_ref = rest

    @pl.when(pl.program_id(2) == 0)
    def _():
        acc_ref[...] = jnp.zeros_like(acc_ref)

    acc_ref[...] += jnp.dot(x_ref[...], w_ref[...],
                            preferred_element_type=jnp.float32)

    @pl.when(pl.program_id(2) == pl.num_programs(2) - 1)
    def _():
        r = acc_ref[...] + b_ref[...]                 # (TM,TN) + (1,TN)
        if has_res:
            r = r + r_ref[...].astype(jnp.float32)    # fused residual add
        if act == "relu":
            r = jnp.maximum(r, 0.0)
        o_ref[...] = r.astype(o_ref.dtype)


def matmul_bias_act(x, w_p, b_p, act="none", residual=None,
                    out_dtype=jnp.bfloat16):
    """act(x @ w + b [+ residual]).  Returns the full padded-N output (M rows kept).

    x:        (M, K)    any float dtype (cast to bf16 at the kernel boundary);
                        K may be < Kp only when the caller pads explicitly (stem).
    w_p:      (Kp, Np)  bf16 weight matrix, pre-padded at param build time
    b_p:      (1, Np)   f32 bias, pre-padded
    residual: (M, Np)   optional tensor fused into the epilogue
    """
    M, K = x.shape
    Kp, Np = w_p.shape

    Mp = _rup(M, 128) if M >= 128 else _rup(M, 8)
    TM = _pick_tile(Mp, (256, 128))                   # small TM for tiny M
    m_tiles = Mp // TM
    if m_tiles >= 2:
        # Big-M conv: parallelism comes from the M axis; keep TN moderate.
        TN = _largest_div_tile(Np, 256)
    else:
        # Small-M (deep layers): wide lane-dense weight tiles, but keep >=2 N
        # tiles when possible so both v7x TensorCores get grid work.
        TN = _largest_div_tile(Np, min(512, max(128, Np // 2)))
    # Few K steps: largest divisor of Kp fitting the per-buffer VMEM budget.
    TK = _largest_div_tile(Kp, _K_TILE_BUDGET // (2 * (TM + TN)))

    xp = jnp.pad(x.astype(jnp.bfloat16), ((0, Mp - M), (0, Kp - K)))
    args = [xp, w_p, b_p]
    in_specs = [
        pl.BlockSpec((TM, TK), lambda i, j, k: (i, k)),
        pl.BlockSpec((TK, TN), lambda i, j, k: (k, j)),
        pl.BlockSpec((1, TN), lambda i, j, k: (0, j)),
    ]
    has_res = residual is not None
    if has_res:
        rp = jnp.pad(residual.astype(jnp.bfloat16), ((0, Mp - M), (0, 0)))
        args.append(rp)
        in_specs.append(pl.BlockSpec((TM, TN), lambda i, j, k: (i, j)))

    bytes_accessed = ((Mp * Kp + Kp * Np + Np) * 2
                      + Mp * Np * jnp.dtype(out_dtype).itemsize
                      + (Mp * Np * 2 if has_res else 0))
    out = pl.pallas_call(
        functools.partial(_mm_kernel, act=act, has_res=has_res),
        out_shape=jax.ShapeDtypeStruct((Mp, Np), out_dtype),
        grid_spec=pltpu.PrefetchScalarGridSpec(
            num_scalar_prefetch=0,
            grid=(Mp // TM, Np // TN, Kp // TK),
            in_specs=in_specs,
            out_specs=pl.BlockSpec((TM, TN), lambda i, j, k: (i, j)),
            scratch_shapes=[pltpu.VMEM((TM, TN), jnp.float32)]),
        compiler_params=pltpu.CompilerParams(
            dimension_semantics=("parallel", "parallel", "arbitrary"),
            vmem_limit_bytes=_VMEM_LIMIT),
        cost_estimate=pl.CostEstimate(flops=2 * Mp * Kp * Np,
                                      transcendentals=0,
                                      bytes_accessed=bytes_accessed),
    )(*args)
    return out if Mp == M else out[:M]


# ----------------------------------------------------------------------------
# Fused FC head: global-avg-pool + fc1..fc5, all weights resident in VMEM.
# ----------------------------------------------------------------------------
def _head_kernel(x_ref, w1, b1, w2, b2, w3, b3, w4, b4, w5, b5, o_ref):
    # Global average pool over the (flattened) spatial axis, f32 accumulation.
    h = jnp.mean(x_ref[...].astype(jnp.float32), axis=1)          # (Mp, 2048)

    def fc(a, w_ref, b_ref):
        return jnp.dot(a.astype(jnp.bfloat16), w_ref[...],
                       preferred_element_type=jnp.float32) + b_ref[...]

    # Dropout layers are the identity in eval mode.
    h = jnp.maximum(fc(h, w1, b1), 0.0)
    h = jnp.maximum(fc(h, w2, b2), 0.0)
    h = jnp.maximum(fc(h, w3, b3), 0.0)
    h = jnp.maximum(fc(h, w4, b4), 0.0)
    o_ref[...] = jnp.arctan(fc(h, w5, b5)) * 2.0                   # torch.atan(x) * 2


# ----------------------------------------------------------------------------
# Maxpool 3x3/s2/p1 + ReLU: pairwise-max tree over shifted views (under jit).
# Zero padding is equivalent to -inf padding here because ReLU follows the max.
# ----------------------------------------------------------------------------
def maxpool3x3s2_relu(x):  # NHWC
    N, H, W, C = x.shape
    Ho, Wo = (H + 2 - 3) // 2 + 1, (W + 2 - 3) // 2 + 1
    xp = jnp.pad(x, ((0, 0), (1, 1), (1, 1), (0, 0)))
    m = None
    for dh in range(3):
        for dw in range(3):
            v = xp[:, dh:dh + 2 * Ho:2, dw:dw + 2 * Wo:2, :]
            m = v if m is None else jnp.maximum(m, v)
    return jnp.maximum(m, 0.0).astype(x.dtype)


# ----------------------------------------------------------------------------
# Conv = im2col (glue, bf16) + Pallas matmul (hot path).  Channel dims stay
# padded to 128-multiples end-to-end (padded channels carry exact zeros).
# ----------------------------------------------------------------------------
def conv2d(x, w_p, b_p, kh, kw, stride=1, padding=0, act="none", residual=None,
           out_dtype=jnp.bfloat16):
    """x: NHWC (C already matches the weight's per-tap input rows);
    w_p: (Kp, Np) bf16 weight with BN folded in; b_p: (1, Np) f32."""
    x = x.astype(jnp.bfloat16)
    N, H, W, C = x.shape
    Ho = (H + 2 * padding - kh) // stride + 1
    Wo = (W + 2 * padding - kw) // stride + 1
    if kh == 1 and kw == 1 and padding == 0:
        xs = x if stride == 1 else x[:, ::stride, ::stride, :]
        patches = xs.reshape(N * Ho * Wo, C)
    else:
        # TODO(synk): fuse im2col into the matmul kernel (tap grid axis + halo).
        xp = jnp.pad(x, ((0, 0), (padding, padding), (padding, padding), (0, 0)))
        cols = [xp[:, i:i + stride * Ho:stride, j:j + stride * Wo:stride, :]
                for i in range(kh) for j in range(kw)]
        patches = jnp.concatenate(cols, axis=-1).reshape(N * Ho * Wo, kh * kw * C)
    res2d = None if residual is None else residual.reshape(N * Ho * Wo,
                                                           residual.shape[-1])
    y = matmul_bias_act(patches, w_p, b_p, act=act, residual=res2d,
                        out_dtype=out_dtype)
    return y.reshape(N, Ho, Wo, w_p.shape[1])


# ----------------------------------------------------------------------------
# Jitted model stages (identical-shape bottlenecks share one compile)
# ----------------------------------------------------------------------------
@jax.jit
def stem_fn(x_nchw, conv1_w, conv1_b):
    x = jnp.transpose(x_nchw, (0, 2, 3, 1))                        # NCHW -> NHWC
    x = conv2d(x, conv1_w, conv1_b, 7, 7, stride=2, padding=3, act="none")
    return maxpool3x3s2_relu(x)                                    # F.relu(maxpool(x))


@functools.partial(jax.jit, static_argnames=("stride", "has_ds"))
def bottleneck_fn(x, p, *, stride, has_ds):
    out = conv2d(x, p["c1w"], p["c1b"], 1, 1, 1, 0, act="relu")
    out = conv2d(out, p["c2w"], p["c2b"], 3, 3, stride, 1, act="relu")
    if has_ds:
        idt = conv2d(x, p["dsw"], p["dsb"], 1, 1, stride, 0, act="none")
    else:
        idt = x
    # residual add + ReLU fused into the c3 matmul epilogue
    return conv2d(out, p["c3w"], p["c3b"], 1, 1, 1, 0, act="relu", residual=idt)


@jax.jit
def head_fn(x, fc1, fc2, fc3, fc4, fc5):
    N, H, W, C = x.shape
    x3 = x.reshape(N, H * W, C)
    Mp = _rup(N, 8)
    xp = jnp.pad(x3, ((0, Mp - N), (0, 0), (0, 0)))
    out = pl.pallas_call(
        _head_kernel,
        out_shape=jax.ShapeDtypeStruct((Mp, fc5[0].shape[1]), jnp.float32),
        compiler_params=pltpu.CompilerParams(vmem_limit_bytes=_VMEM_LIMIT),
    )(xp, fc1[0], fc1[1], fc2[0], fc2[1], fc3[0], fc3[1],
      fc4[0], fc4[1], fc5[0], fc5[1])
    return out[:N, :1]


# ----------------------------------------------------------------------------
# Deterministic parameter construction (ResNet-101 + FC head), pre-padded bf16
# ----------------------------------------------------------------------------
class KeyGen:
    def __init__(self, seed=0):
        self._key = jax.random.PRNGKey(seed)

    def __call__(self):
        self._key, sub = jax.random.split(self._key)
        return sub


def conv_bn_params(kg, kh, kw, cin, cout, cin_pad=None, eps=1e-5):
    """BN-folded conv weight reshaped to (Kp, Np) bf16.  If cin_pad is given the
    weight gets zero rows per tap for the padded input channels, so a feature
    map flowing with padded channels multiplies against zeros (exact)."""
    fan_in = kh * kw * cin
    w = jax.random.normal(kg(), (kh, kw, cin, cout), jnp.float32) * (2.0 / fan_in) ** 0.5
    gamma = jnp.ones((cout,), jnp.float32)
    beta = jnp.zeros((cout,), jnp.float32)
    mean = jnp.zeros((cout,), jnp.float32)
    var = jnp.ones((cout,), jnp.float32)
    scale = gamma / jnp.sqrt(var + eps)                    # fold BN into conv
    w = w * scale
    b = beta - mean * scale
    Np = _rup(cout, 128)
    if cin_pad is not None:
        w = jnp.pad(w, ((0, 0), (0, 0), (0, cin_pad - cin), (0, 0)))   # per-tap cin pad
        K = kh * kw * cin_pad
    else:
        K = kh * kw * cin
    Kp = _rup(K, 128)
    w_p = jnp.pad(w.reshape(K, cout), ((0, Kp - K), (0, Np - cout))).astype(jnp.bfloat16)
    b_p = jnp.pad(b.reshape(1, cout), ((0, 0), (0, Np - cout))).astype(jnp.float32)
    return w_p, b_p


def linear_params(kg, fin, fout):
    w = jax.random.normal(kg(), (fin, fout), jnp.float32) / jnp.sqrt(float(fin))
    b = 0.01 * jax.random.normal(kg(), (fout,), jnp.float32)
    Kp, Np = _rup(fin, 128), _rup(fout, 128)
    w_p = jnp.pad(w, ((0, Kp - fin), (0, Np - fout))).astype(jnp.bfloat16)
    b_p = jnp.pad(b.reshape(1, fout), ((0, 0), (0, Np - fout))).astype(jnp.float32)
    return w_p, b_p


def build_params(kg):
    params = {"conv1": conv_bn_params(kg, 7, 7, 3, 64)}    # image input: no cin pad
    blocks = []
    cin = 64
    for width, nblocks, stride in [(64, 3, 1), (128, 4, 2), (256, 23, 2), (512, 3, 2)]:
        w_pad = _rup(width, 128)
        for bi in range(nblocks):
            s = stride if bi == 0 else 1
            cin_b = cin if bi == 0 else width * 4
            cin_b_pad = _rup(cin_b, 128)
            has_ds = bi == 0 and (s != 1 or cin_b != width * 4)
            p = {}
            p["c1w"], p["c1b"] = conv_bn_params(kg, 1, 1, cin_b, width, cin_pad=cin_b_pad)
            p["c2w"], p["c2b"] = conv_bn_params(kg, 3, 3, width, width, cin_pad=w_pad)
            p["c3w"], p["c3b"] = conv_bn_params(kg, 1, 1, width, width * 4, cin_pad=w_pad)
            if has_ds:
                p["dsw"], p["dsb"] = conv_bn_params(kg, 1, 1, cin_b, width * 4,
                                                    cin_pad=cin_b_pad)
            blocks.append((p, dict(stride=s, has_ds=has_ds)))
        cin = width * 4
    params["blocks"] = blocks
    params["fc1"] = linear_params(kg, 2048, 1164)
    params["fc2"] = linear_params(kg, 1164, 100)
    params["fc3"] = linear_params(kg, 100, 50)
    params["fc4"] = linear_params(kg, 50, 10)
    params["fc5"] = linear_params(kg, 10, 1)
    return params


# ----------------------------------------------------------------------------
# Forward pass
# ----------------------------------------------------------------------------
def self_driving_forward(x_nchw, params):
    x = stem_fn(x_nchw, *params["conv1"])                  # conv1 + bn1 + relu(maxpool)
    for p, cfg in params["blocks"]:                        # layer1..layer4
        x = bottleneck_fn(x, p, **cfg)
    return head_fn(x, params["fc1"], params["fc2"], params["fc3"],
                   params["fc4"], params["fc5"])


if __name__ == "__main__":
    kg = KeyGen(0)
    params = build_params(kg)

    x = jax.random.normal(jax.random.PRNGKey(0), (2, 3, 64, 64), jnp.float32)
    y = self_driving_forward(x, params)
    y = jax.block_until_ready(y)
    assert y.shape == (2, 1), y.shape
    print("KERNEL_OK")
</pallas_src>

<mosaic_0001>
module attributes {stable_mosaic.version = 11 : i64} {
  func.func @_mm_kernel(%arg0: i32, %arg1: i32, %arg2: i32, %arg3: memref<256x256xbf16, #tpu.memory_space<vmem>>, %arg4: memref<256x128xbf16, #tpu.memory_space<vmem>>, %arg5: memref<1x128xf32, #tpu.memory_space<vmem>>, %arg6: memref<256x128xbf16, #tpu.memory_space<vmem>>, %arg7: memref<256x128xf32, #tpu.memory_space<vmem>>) attributes {dimension_semantics = [#tpu.dimension_semantics<parallel>, #tpu.dimension_semantics<parallel>, #tpu.dimension_semantics<arbitrary>], iteration_bounds = array<i64: 8, 1, 1>, scalar_prefetch = 0 : i64, scratch_operands = 1 : i64, tpu.core_type = #tpu.core_type<tc>, window_params = [{transform_indices = @transform_0, window_bounds = array<i64: 256, 256>}, {transform_indices = @transform_1, window_bounds = array<i64: 256, 128>}, {transform_indices = @transform_2, window_bounds = array<i64: 1, 128>}, {transform_indices = @transform_3, window_bounds = array<i64: 256, 128>}]} {
    %c0_i32 = arith.constant 0 : i32
    %0 = arith.cmpi eq, %arg2, %c0_i32 : i32
    %1 = arith.extui %0 : i1 to i32
    %c0_i32_0 = arith.constant 0 : i32
    %2 = arith.cmpi ne, %1, %c0_i32_0 : i32
    scf.if %2 {
      %cst_10 = arith.constant 0.000000e+00 : f32
      %12 = vector.broadcast %cst_10 : f32 to vector<256x128xf32>
      %c0_11 = arith.constant 0 : index
      %c0_12 = arith.constant 0 : index
      %13 = vector.load %arg7[%c0_11, %c0_12] : memref<256x128xf32, #tpu.memory_space<vmem>>, vector<256x128xf32>
      tpu.vector_store %arg7[%c0_11, %c0_12], %12 {strides = array<i32>} : memref<256x128xf32, #tpu.memory_space<vmem>>, vector<256x128xf32>,
    } else {
    }
    %c0 = arith.constant 0 : index
    %c0_1 = arith.constant 0 : index
    %3 = vector.load %arg7[%c0, %c0_1] : memref<256x128xf32, #tpu.memory_space<vmem>>, vector<256x128xf32>
    %c0_2 = arith.constant 0 : index
    %c0_3 = arith.constant 0 : index
    %4 = vector.load %arg3[%c0_2, %c0_3] : memref<256x256xbf16, #tpu.memory_space<vmem>>, vector<256x256xbf16>
    %c0_4 = arith.constant 0 : index
    %c0_5 = arith.constant 0 : index
    %5 = vector.load %arg4[%c0_4, %c0_5] : memref<256x128xbf16, #tpu.memory_space<vmem>>, vector<256x128xbf16>
    %cst = arith.constant dense<0.000000e+00> : vector<256x128xf32>
    %6 = tpu.matmul %4, %5, %cst {dimension_numbers = #tpu.dot_dimension_numbers<[1], [0], [0], [1], [0, 0, 1, 1], [], []>} : vector<256x256xbf16>, vector<256x128xbf16>, vector<256x128xf32> -> vector<256x128xf32>
    %7 = arith.addf %3, %6 : vector<256x128xf32>
    %c0_6 = arith.constant 0 : index
    %c0_7 = arith.constant 0 : index
    %8 = vector.load %arg7[%c0_6, %c0_7] : memref<256x128xf32, #tpu.memory_space<vmem>>, vector<256x128xf32>
    tpu.vector_store %arg7[%c0_6, %c0_7], %7 {strides = array<i32>} : memref<256x128xf32, #tpu.memory_space<vmem>>, vector<256x128xf32>,
    %c0_i32_8 = arith.constant 0 : i32
    %9 = arith.cmpi eq, %arg2, %c0_i32_8 : i32
    %10 = arith.extui %9 : i1 to i32
    %c0_i32_9 = arith.constant 0 : i32
    %11 = arith.cmpi ne, %10, %c0_i32_9 : i32
    scf.if %11 {
      %c0_10 = arith.constant 0 : index
      %c0_11 = arith.constant 0 : index
      %12 = vector.load %arg7[%c0_10, %c0_11] : memref<256x128xf32, #tpu.memory_space<vmem>>, vector<256x128xf32>
      %c0_12 = arith.constant 0 : index
      %c0_13 = arith.constant 0 : index
      %13 = vector.load %arg5[%c0_12, %c0_13] : memref<1x128xf32, #tpu.memory_space<vmem>>, vector<1x128xf32>
      %14 = vector.broadcast %13 : vector<1x128xf32> to vector<256x128xf32>
      %15 = arith.addf %12, %14 : vector<256x128xf32>
      %16 = arith.truncf %15 : vector<256x128xf32> to vector<256x128xbf16>
      %c0_14 = arith.constant 0 : index
      %c0_15 = arith.constant 0 : index
      %17 = vector.load %arg6[%c0_14, %c0_15] : memref<256x128xbf16, #tpu.memory_space<vmem>>, vector<256x128xbf16>
      tpu.vector_store %arg6[%c0_14, %c0_15], %16 {strides = array<i32>} : memref<256x128xbf16, #tpu.memory_space<vmem>>, vector<256x128xbf16>,
    } else {
    }
    return
  }
  func.func @transform_0(%arg0: i32, %arg1: i32, %arg2: i32) -> (i32, i32) {
    %c0_i32 = arith.constant 0 : i32
    return %arg0, %arg2 : i32, i32
  }
  func.func @transform_1(%arg0: i32, %arg1: i32, %arg2: i32) -> (i32, i32) {
    %c0_i32 = arith.constant 0 : i32
    return %arg2, %arg1 : i32, i32
  }
  func.func @transform_2(%arg0: i32, %arg1: i32, %arg2: i32) -> (i32, i32) {
    %c0_i32 = arith.constant 0 : i32
    %c0_i32_0 = arith.constant 0 : i32
    return %c0_i32, %arg1 : i32, i32
  }
  func.func @transform_3(%arg0: i32, %arg1: i32, %arg2: i32) -> (i32, i32) {
    %c0_i32 = arith.constant 0 : i32
    return %arg0, %arg1 : i32, i32
  }
}

</mosaic_0001>

<llo_original>
// kernel: stem_fn.1
$region0: #{stem_fn.1}
  #allocation0 [shape = 'u32[]', space=smem, size = 0x4, offset = 0x4, fixed_abs, tag = 'smem constant byte address 0x4 - core index']
  #allocation1 [shape = 'u32[144,128]{1,0:T(1,128)}', space=vmem, size = 0x12000, scoped, tag = 'internal scratch']
  #allocation2 [shape = 'f32[256,128]{1,0:T(8,128)}', space=vmem, size = 0x20000, scoped, tag = 'scratch operand']
  %s0 = inlined_call_operand.vmem [shape: bf16[2048,256], index: 0, kind: input, shape index: {}]
  %s1 = inlined_call_operand.vmem [shape: bf16[256,128], index: 1, kind: input, shape index: {}]
  %s2 = inlined_call_operand.vmem [shape: f32[1,128], index: 2, kind: input, shape index: {}]
  %s3 = inlined_call_operand.vmem [shape: bf16[2048,128], index: 3, kind: output, shape index: {}]
  %s4 = sld [smem:[#allocation0]]
  $region53: #{stem_fn.1} parent=0
    _
  %s6 = ssub.s32 1, %s4
  %s7 = scalar_select 0, %s6, %s4
  loop: start=0, step=1, limit=10
  $region2: #{stem_fn.1} parent=0 // loop_pre_header
    _
  $region3: #{stem_fn.1} parent=0 // loop_header
    %s9 = sphi 0, %s13
    %p10 = scmp.ge.s32.totalorder %s9, 10
    %s16 = sphi 0, %s35
    %s17 = sphi 0, %s31
    %s18 = sphi 0, %s27
    %s19 = sphi 0, %s16
    %s20 = sphi 0, %s17
    %s21 = sphi 0, %s18
    %s22 = sphi 0, %s19
    %s23 = sphi 0, %s20
    %s24 = sphi 0, %s21
    %s40 = sphi 0, %s42
    %s43 = sphi 0, %s40
    %s44 = sphi 0, %s43
    %s60 = sphi 0, %s44
    %s68 = sphi 0, %s70
    %s71 = sphi 0, %s68
    %s72 = sphi 0, %s71
    %s88 = sphi 0, %s72
    %s94 = sphi 0, %s96
    %s97 = sphi 0, %s94
    %s98 = sphi 0, %s97
    %s114 = sphi 0, %s98
    %s122 = sphi 0, %s124
    %s125 = sphi 0, %s122
    %s126 = sphi 0, %s125
    %s142 = sphi 0, %s126
  $region4: #{stem_fn.1} parent=0 // loop_header_branch
    %12 = sbr.rel (%p10) target = $region8
  $region5: #{stem_fn.1} parent=0 // loop_body
    %s14 = ssub.s32 %s9, 1
    %s15 = ssub.s32 %s9, 2
    %s25 = sadd.s32 1, %s18
    %p26 = scmp.ge.s32.totalorder %s25, 1
    %s27 = scalar_select %p26, 0, %s25
    %s28 = sadd.s32 1, %s17
    %s29 = scalar_select %p26, %s28, %s17
    %p30 = scmp.ge.s32.totalorder %s29, 1
    %s31 = scalar_select %p30, 0, %s29
    %s32 = sadd.s32 1, %s16
    %s33 = scalar_select %p30, %s32, %s16
    %p34 = scmp.ge.s32.totalorder %s33, 8
    %s35 = scalar_select %p34, 0, %s33
    %s36 = ssub.s32 %s16, %s35
    %s37 = ssub.s32 %s18, %s27
    %s38 = sor.u32 %s36, %s37
    %p39 = scmp.eq.s32.totalorder %s38, 0
    %s41 = sadd.s32 %s40, 1
    %s42 = scalar_select %p39, %s40, %s41
    %p45 = pneg %p39
    %p46 = scmp.eq.s32.totalorder %s9, 7
    %p47 = por %p45, %p46
    %p48 = scmp.ne.s32.totalorder %s40, %s43
    %p49 = scmp.eq.s32.totalorder %s9, 0
    %p50 = por %p48, %p49
    %p51 = scmp.ne.s32.totalorder %s40, %s43
    %p52 = scmp.eq.s32.totalorder %s14, 7
    %p53 = por %p51, %p52
    %p54 = scmp.ne.s32.totalorder %s43, %s44
    %p55 = scmp.eq.s32.totalorder %s14, 0
    %p56 = por %p54, %p55
    %p57 = scmp.ne.s32.totalorder %s43, %s44
    %p58 = scmp.eq.s32.totalorder %s15, 7
    %p59 = por %p57, %p58
    %p61 = scmp.ne.s32.totalorder %s44, %s60
    %p62 = scmp.eq.s32.totalorder %s15, 0
    %p63 = por %p61, %p62
    %s64 = ssub.s32 %s18, %s27
    %s65 = ssub.s32 %s17, %s31
    %s66 = sor.u32 %s64, %s65
    %p67 = scmp.eq.s32.totalorder %s66, 0
    %s69 = sadd.s32 %s68, 1
    %s70 = scalar_select %p67, %s68, %s69
    %p73 = pneg %p67
    %p74 = scmp.eq.s32.totalorder %s9, 7
    %p75 = por %p73, %p74
    %p76 = scmp.ne.s32.totalorder %s68, %s71
    %p77 = scmp.eq.s32.totalorder %s9, 0
    %p78 = por %p76, %p77
    %p79 = scmp.ne.s32.totalorder %s68, %s71
    %p80 = scmp.eq.s32.totalorder %s14, 7
    %p81 = por %p79, %p80
    %p82 = scmp.ne.s32.totalorder %s71, %s72
    %p83 = scmp.eq.s32.totalorder %s14, 0
    %p84 = por %p82, %p83
    %p85 = scmp.ne.s32.totalorder %s71, %s72
    %p86 = scmp.eq.s32.totalorder %s15, 7
    %p87 = por %p85, %p86
    %p89 = scmp.ne.s32.totalorder %s72, %s88
    %p90 = scmp.eq.s32.totalorder %s15, 0
    %p91 = por %p89, %p90
    %s92 = ssub.s32 %s17, %s31
    %p93 = scmp.eq.s32.totalorder %s92, 0
    %s95 = sadd.s32 %s94, 1
    %s96 = scalar_select %p93, %s94, %s95
    %p99 = pneg %p93
    %p100 = scmp.eq.s32.totalorder %s9, 7
    %p101 = por %p99, %p100
    %p102 = scmp.ne.s32.totalorder %s94, %s97
    %p103 = scmp.eq.s32.totalorder %s9, 0
    %p104 = por %p102, %p103
    %p105 = scmp.ne.s32.totalorder %s94, %s97
    %p106 = scmp.eq.s32.totalorder %s14, 7
    %p107 = por %p105, %p106
    %p108 = scmp.ne.s32.totalorder %s97, %s98
    %p109 = scmp.eq.s32.totalorder %s14, 0
    %p110 = por %p108, %p109
    %p111 = scmp.ne.s32.totalorder %s97, %s98
    %p112 = scmp.eq.s32.totalorder %s15, 7
    %p113 = por %p111, %p112
    %p115 = scmp.ne.s32.totalorder %s98, %s114
    %p116 = scmp.eq.s32.totalorder %s15, 0
    %p117 = por %p115, %p116
    %s118 = ssub.s32 %s16, %s35
    %s119 = ssub.s32 %s17, %s31
    %s120 = sor.u32 %s118, %s119
    %p121 = scmp.eq.s32.totalorder %s120, 0
    %s123 = sadd.s32 %s122, 1
    %s124 = scalar_select %p121, %s122, %s123
    %p127 = pneg %p121
    %p128 = scmp.eq.s32.totalorder %s9, 7
    %p129 = por %p127, %p128
    %p130 = scmp.ne.s32.totalorder %s122, %s125
    %p131 = scmp.eq.s32.totalorder %s9, 0
    %p132 = por %p130, %p131
    %p133 = scmp.ne.s32.totalorder %s122, %s125
    %p134 = scmp.eq.s32.totalorder %s14, 7
    %p135 = por %p133, %p134
    %p136 = scmp.ne.s32.totalorder %s125, %s126
    %p137 = scmp.eq.s32.totalorder %s14, 0
    %p138 = por %p136, %p137
    %p139 = scmp.ne.s32.totalorder %s125, %s126
    %p140 = scmp.eq.s32.totalorder %s15, 7
    %p141 = por %p139, %p140
    %p143 = scmp.ne.s32.totalorder %s126, %s142
    %p144 = scmp.eq.s32.totalorder %s15, 0
    %p145 = por %p143, %p144
    %p146 = scmp.le.s32.totalorder 1, %s9
    %p147 = scmp.lt.s32.totalorder %s9, 9
    %p148 = pnand %p146, %p147
    %p149 = pneg %p148
    // Predicated region
    $region9: #{stem_fn.1} parent=5 // pred_check
      _
    $region10: #{stem_fn.1} parent=5 // pred_check_branch
      %151 = sbr.rel (%p148) target = $region12
    $region11: #{stem_fn.1} parent=5 // pred_region
      %s152 = ssub.s32 %s9, 1
      // Predicated region
      $region13: #{stem_fn.1} parent=11 // pred_check
        %p153 = pneg %p84
      $region14: #{stem_fn.1} parent=11 // pred_check_branch
        %155 = sbr.rel (%p153) target = $region16
      $region15: #{stem_fn.1} parent=11 // pred_region
        %s156 = smul.u32 32, %s21
        %p157 = scmp.lt.s32.totalorder %s156, 31
        %s158 = scalar_select %p157, %s156, 31
        %p159 = scmp.lt.s32.totalorder %s20, 0
        %s160 = scalar_select %p159, %s20, 0
        %s161 = sadd.s32 %s160, %s158
        %s162 = smul.addr %s161, 4
        %s163 = scalar_lea.vmem %s1, %s162
        %s164 = smul.u32 32, %s21
      $region16: #{stem_fn.1} parent=11 // pred_fallthru
        _
      // Predicated region
      $region17: #{stem_fn.1} parent=11 // pred_check
        %p165 = pneg %p110
      $region18: #{stem_fn.1} parent=11 // pred_check_branch
        %167 = sbr.rel (%p165) target = $region20
      $region19: #{stem_fn.1} parent=11 // pred_region
        %p168 = scmp.lt.s32.totalorder %s20, 0
        %s169 = scalar_select %p168, %s20, 0
        %s170 = scalar_lea.vmem %s2, %s169
      $region20: #{stem_fn.1} parent=11 // pred_fallthru
        _
    $region12: #{stem_fn.1} parent=5 // pred_fallthru
      _
    %p171 = scmp.lt.s32.totalorder %s9, 8
    // Predicated region
    $region21: #{stem_fn.1} parent=5 // pred_check
      %p172 = pneg %p171
    $region22: #{stem_fn.1} parent=5 // pred_check_branch
      %174 = sbr.rel (%p172) target = $region24
    $region23: #{stem_fn.1} parent=5 // pred_region
      // Predicated region
      $region25: #{stem_fn.1} parent=23 // pred_check
        %p175 = pneg %p50
      $region26: #{stem_fn.1} parent=23 // pred_check_branch
        %177 = sbr.rel (%p175) target = $region28
      $region27: #{stem_fn.1} parent=23 // pred_region
        %s178 = smul.u32 32, %s16
        %s179 = smul.u32 2, %s18
        %p180 = scmp.lt.s32.totalorder %s178, 255
        %s181 = scalar_select %p180, %s178, 255
        %p182 = scmp.lt.s32.totalorder %s179, 1
        %s183 = scalar_select %p182, %s179, 1
        %s184 = smul.addr %s181, 2
        %s185 = sadd.s32 %s183, %s184
        %s186 = smul.addr %s185, 4
        %s187 = scalar_lea.vmem %s0, %s186
        %s188 = smul.u32 32, %s16
        %s189 = smul.u32 2, %s18
      $region28: #{stem_fn.1} parent=23 // pred_fallthru
        _
    $region24: #{stem_fn.1} parent=5 // pred_fallthru
      _
    %p190 = scmp.le.s32.totalorder 1, %s9
    %p191 = scmp.lt.s32.totalorder %s9, 9
    %p192 = pnand %p190, %p191
    %p193 = pneg %p192
    // Predicated region
    $region29: #{stem_fn.1} parent=5 // pred_check
      _
    $region30: #{stem_fn.1} parent=5 // pred_check_branch
      %195 = sbr.rel (%p192) target = $region32
    $region31: #{stem_fn.1} parent=5 // pred_region
      %s196 = ssub.s32 %s9, 1
      %s197 = smul.u32 32, %s19
      %s198 = smul.u32 2, %s21
      %p199 = scmp.lt.s32.totalorder %s197, 255
      %s200 = scalar_select %p199, %s197, 255
      %p201 = scmp.lt.s32.totalorder %s198, 1
      %s202 = scalar_select %p201, %s198, 1
      %s203 = smul.addr %s200, 2
      %s204 = sadd.s32 %s202, %s203
      %s205 = smul.addr %s204, 4
      %s206 = scalar_lea.vmem %s0, %s205
      %p207 = pneg %p56
      %p208 = pneg %p53
      %s209 = smul.u32 32, %s21
      %p210 = scmp.lt.s32.totalorder %s209, 31
      %s211 = scalar_select %p210, %s209, 31
      %p212 = scmp.lt.s32.totalorder %s20, 0
      %s213 = scalar_select %p212, %s20, 0
      %s214 = sadd.s32 %s213, %s211
      %s215 = smul.addr %s214, 4
      %s216 = scalar_lea.vmem %s1, %s215
      %p217 = pneg %p84
      %p218 = pneg %p81
      %p219 = scmp.lt.s32.totalorder %s20, 0
      %s220 = scalar_select %p219, %s20, 0
      %s221 = scalar_lea.vmem %s2, %s220
      %p222 = pneg %p110
      %p223 = pneg %p107
      %p224 = pneg %p138
      %p225 = pneg %p135
      %s226 = smul.u32 32, %s19
      %p227 = scmp.lt.s32.totalorder %s226, 255
      %s228 = scalar_select %p227, %s226, 255
      %p229 = scmp.lt.s32.totalorder %s20, 0
      %s230 = scalar_select %p229, %s20, 0
      %s231 = sadd.s32 %s230, %s228
      %s232 = smul.addr %s231, 4
      %s233 = scalar_lea.vmem %s3, %s232
      %s234 = smul.u32 32, %s19
      %s235 = smul.u32 2, %s21
      %p236 = scmp.lt.s32.totalorder %s234, 255
      %s237 = scalar_select %p236, %s234, 255
      %p238 = scmp.lt.s32.totalorder %s235, 1
      %s239 = scalar_select %p238, %s235, 1
      %s240 = smul.addr %s237, 2
      %s241 = sadd.s32 %s239, %s240
      %s242 = smul.addr %s241, 4
      %s243 = scalar_lea.vmem %s0, %s242
      %s244 = smul.u32 32, %s19
      %s245 = smul.u32 2, %s21
      %s246 = smul.u32 32, %s21
      %p247 = scmp.lt.s32.totalorder %s246, 31
      %s248 = scalar_select %p247, %s246, 31
      %p249 = scmp.lt.s32.totalorder %s20, 0
      %s250 = scalar_select %p249, %s20, 0
      %s251 = sadd.s32 %s250, %s248
      %s252 = smul.addr %s251, 4
      %s253 = scalar_lea.vmem %s1, %s252
      %s254 = smul.u32 32, %s21
      %p255 = scmp.lt.s32.totalorder %s20, 0
      %s256 = scalar_select %p255, %s20, 0
      %s257 = scalar_lea.vmem %s2, %s256
      %s258 = smul.u32 32, %s19
      %p259 = scmp.lt.s32.totalorder %s258, 255
      %s260 = scalar_select %p259, %s258, 255
      %p261 = scmp.lt.s32.totalorder %s20, 0
      %s262 = scalar_select %p261, %s20, 0
      %s263 = sadd.s32 %s262, %s260
      %s264 = smul.addr %s263, 4
      %s265 = scalar_lea.vmem %s3, %s264
      %s266 = smul.u32 32, %s19
      %p268 = scmp.eq.s32.totalorder %s21, 0
      // Predicated region
      $region33: #{stem_fn.1} parent=31 // pred_check
        %p269 = pneg %p268
      $region34: #{stem_fn.1} parent=31 // pred_check_branch
        %271 = sbr.rel (%p269) target = $region36
      $region35: #{stem_fn.1} parent=31 // pred_region
        %272 = vst [vmem:[#allocation2] sm:$0xff] 0.0
        %273 = vst [vmem:[#allocation2 + $0x8] sm:$0xff] 0.0
        %274 = vst [vmem:[#allocation2 + $0x10] sm:$0xff] 0.0
        %275 = vst [vmem:[#allocation2 + $0x18] sm:$0xff] 0.0
        %276 = vst [vmem:[#allocation2 + $0x20] sm:$0xff] 0.0
        %277 = vst [vmem:[#allocation2 + $0x28] sm:$0xff] 0.0
        %278 = vst [vmem:[#allocation2 + $0x30] sm:$0xff] 0.0
        %279 = vst [vmem:[#allocation2 + $0x38] sm:$0xff] 0.0
        %280 = vst [vmem:[#allocation2 + $0x40] sm:$0xff] 0.0
        %281 = vst [vmem:[#allocation2 + $0x48] sm:$0xff] 0.0
        %282 = vst [vmem:[#allocation2 + $0x50] sm:$0xff] 0.0
        %283 = vst [vmem:[#allocation2 + $0x58] sm:$0xff] 0.0
        %284 = vst [vmem:[#allocation2 + $0x60] sm:$0xff] 0.0
        %285 = vst [vmem:[#allocation2 + $0x68] sm:$0xff] 0.0
        %286 = vst [vmem:[#allocation2 + $0x70] sm:$0xff] 0.0
        %287 = vst [vmem:[#allocation2 + $0x78] sm:$0xff] 0.0
        %288 = vst [vmem:[#allocation2 + $0x80] sm:$0xff] 0.0
        %289 = vst [vmem:[#allocation2 + $0x88] sm:$0xff] 0.0
        %290 = vst [vmem:[#allocation2 + $0x90] sm:$0xff] 0.0
        %291 = vst [vmem:[#allocation2 + $0x98] sm:$0xff] 0.0
        %292 = vst [vmem:[#allocation2 + $0xa0] sm:$0xff] 0.0
        %293 = vst [vmem:[#allocation2 + $0xa8] sm:$0xff] 0.0
        %294 = vst [vmem:[#allocation2 + $0xb0] sm:$0xff] 0.0
        %295 = vst [vmem:[#allocation2 + $0xb8] sm:$0xff] 0.0
        %296 = vst [vmem:[#allocation2 + $0xc0] sm:$0xff] 0.0
        %297 = vst [vmem:[#allocation2 + $0xc8] sm:$0xff] 0.0
        %298 = vst [vmem:[#allocation2 + $0xd0] sm:$0xff] 0.0
        %299 = vst [vmem:[#allocation2 + $0xd8] sm:$0xff] 0.0
        %300 = vst [vmem:[#allocation2 + $0xe0] sm:$0xff] 0.0
        %301 = vst [vmem:[#allocation2 + $0xe8] sm:$0xff] 0.0
        %302 = vst [vmem:[#allocation2 + $0xf0] sm:$0xff] 0.0
        %303 = vst [vmem:[#allocation2 + $0xf8] sm:$0xff] 0.0
      $region36: #{stem_fn.1} parent=31 // pred_fallthru
        _
      %v304 = vld [vmem:[#allocation2] sm:$0xff]
      %v305 = vld [vmem:[#allocation2 + $0x8] sm:$0xff]
      %v306 = vld [vmem:[#allocation2 + $0x10] sm:$0xff]
      %v307 = vld [vmem:[#allocation2 + $0x18] sm:$0xff]
      %v308 = vld [vmem:[#allocation2 + $0x20] sm:$0xff]
      %v309 = vld [vmem:[#allocation2 + $0x28] sm:$0xff]
      %v310 = vld [vmem:[#allocation2 + $0x30] sm:$0xff]
      %v311 = vld [vmem:[#allocation2 + $0x38] sm:$0xff]
      %v312 = vld [vmem:[#allocation2 + $0x40] sm:$0xff]
      %v313 = vld [vmem:[#allocation2 + $0x48] sm:$0xff]
      %v314 = vld [vmem:[#allocation2 + $0x50] sm:$0xff]
      %v315 = vld [vmem:[#allocation2 + $0x58] sm:$0xff]
      %v316 = vld [vmem:[#allocation2 + $0x60] sm:$0xff]
      %v317 = vld [vmem:[#allocation2 + $0x68] sm:$0xff]
      %v318 = vld [vmem:[#allocation2 + $0x70] sm:$0xff]
      %v319 = vld [vmem:[#allocation2 + $0x78] sm:$0xff]
      %v320 = vld [vmem:[#allocation2 + $0x80] sm:$0xff]
      %v321 = vld [vmem:[#allocation2 + $0x88] sm:$0xff]
      %v322 = vld [vmem:[#allocation2 + $0x90] sm:$0xff]
      %v323 = vld [vmem:[#allocation2 + $0x98] sm:$0xff]
      %v324 = vld [vmem:[#allocation2 + $0xa0] sm:$0xff]
      %v325 = vld [vmem:[#allocation2 + $0xa8] sm:$0xff]
      %v326 = vld [vmem:[#allocation2 + $0xb0] sm:$0xff]
      %v327 = vld [vmem:[#allocation2 + $0xb8] sm:$0xff]
      %v328 = vld [vmem:[#allocation2 + $0xc0] sm:$0xff]
      %v329 = vld [vmem:[#allocation2 + $0xc8] sm:$0xff]
      %v330 = vld [vmem:[#allocation2 + $0xd0] sm:$0xff]
      %v331 = vld [vmem:[#allocation2 + $0xd8] sm:$0xff]
      %v332 = vld [vmem:[#allocation2 + $0xe0] sm:$0xff]
      %v333 = vld [vmem:[#allocation2 + $0xe8] sm:$0xff]
      %v334 = vld [vmem:[#allocation2 + $0xf0] sm:$0xff]
      %v335 = vld [vmem:[#allocation2 + $0xf8] sm:$0xff]
      %v336 = vld [vmem:[%s243] sm:$0xff]
      %v337 = vld [vmem:[%s243 + $0x8] sm:$0xff]
      %v338 = vld [vmem:[%s243 + $0x10] sm:$0xff]
      %v339 = vld [vmem:[%s243 + $0x18] sm:$0xff]
      %v340 = vld [vmem:[%s243 + $0x20] sm:$0xff]
      %v341 = vld [vmem:[%s243 + $0x28] sm:$0xff]
      %v342 = vld [vmem:[%s243 + $0x30] sm:$0xff]
      %v343 = vld [vmem:[%s243 + $0x38] sm:$0xff]
      %v344 = vld [vmem:[%s243 + $0x40] sm:$0xff]
      %v345 = vld [vmem:[%s243 + $0x48] sm:$0xff]
      %v346 = vld [vmem:[%s243 + $0x50] sm:$0xff]
      %v347 = vld [vmem:[%s243 + $0x58] sm:$0xff]
      %v348 = vld [vmem:[%s243 + $0x60] sm:$0xff]
      %v349 = vld [vmem:[%s243 + $0x68] sm:$0xff]
      %v350 = vld [vmem:[%s243 + $0x70] sm:$0xff]
      %v351 = vld [vmem:[%s243 + $0x78] sm:$0xff]
      %v352 = vld [vmem:[%s243 + $0x80] sm:$0xff]
      %v353 = vld [vmem:[%s243 + $0x88] sm:$0xff]
      %v354 = vld [vmem:[%s243 + $0x90] sm:$0xff]
      %v355 = vld [vmem:[%s243 + $0x98] sm:$0xff]
      %v356 = vld [vmem:[%s243 + $0xa0] sm:$0xff]
      %v357 = vld [vmem:[%s243 + $0xa8] sm:$0xff]
      %v358 = vld [vmem:[%s243 + $0xb0] sm:$0xff]
      %v359 = vld [vmem:[%s243 + $0xb8] sm:$0xff]
      %v360 = vld [vmem:[%s243 + $0xc0] sm:$0xff]
      %v361 = vld [vmem:[%s243 + $0xc8] sm:$0xff]
      %v362 = vld [vmem:[%s243 + $0xd0] sm:$0xff]
      %v363 = vld [vmem:[%s243 + $0xd8] sm:$0xff]
      %v364 = vld [vmem:[%s243 + $0xe0] sm:$0xff]
      %v365 = vld [vmem:[%s243 + $0xe8] sm:$0xff]
      %v366 = vld [vmem:[%s243 + $0xf0] sm:$0xff]
      %v367 = vld [vmem:[%s243 + $0xf8] sm:$0xff]
      %v368 = vld [vmem:[%s253] sm:$0xf]
      %v369 = vld [vmem:[%s253 + $0x4] sm:$0xf]
      %v370 = vld [vmem:[%s253 + $0x8] sm:$0xf]
      %v371 = vld [vmem:[%s253 + $0xc] sm:$0xf]
      %v372 = vld [vmem:[%s253 + $0x10] sm:$0xf]
      %v373 = vld [vmem:[%s253 + $0x14] sm:$0xf]
      %v374 = vld [vmem:[%s253 + $0x18] sm:$0xf]
      %v375 = vld [vmem:[%s253 + $0x1c] sm:$0xf]
      %v376 = vld [vmem:[%s253 + $0x20] sm:$0xf]
      %v377 = vld [vmem:[%s253 + $0x24] sm:$0xf]
      %v378 = vld [vmem:[%s253 + $0x28] sm:$0xf]
      %v379 = vld [vmem:[%s253 + $0x2c] sm:$0xf]
      %v380 = vld [vmem:[%s253 + $0x30] sm:$0xf]
      %v381 = vld [vmem:[%s253 + $0x34] sm:$0xf]
      %v382 = vld [vmem:[%s253 + $0x38] sm:$0xf]
      %v383 = vld [vmem:[%s253 + $0x3c] sm:$0xf]
      %v384 = vld [vmem:[%s253 + $0x40] sm:$0xf]
      %v385 = vld [vmem:[%s253 + $0x44] sm:$0xf]
      %v386 = vld [vmem:[%s253 + $0x48] sm:$0xf]
      %v387 = vld [vmem:[%s253 + $0x4c] sm:$0xf]
      %v388 = vld [vmem:[%s253 + $0x50] sm:$0xf]
      %v389 = vld [vmem:[%s253 + $0x54] sm:$0xf]
      %v390 = vld [vmem:[%s253 + $0x58] sm:$0xf]
      %v391 = vld [vmem:[%s253 + $0x5c] sm:$0xf]
      %v392 = vld [vmem:[%s253 + $0x60] sm:$0xf]
      %v393 = vld [vmem:[%s253 + $0x64] sm:$0xf]
      %v394 = vld [vmem:[%s253 + $0x68] sm:$0xf]
      %v395 = vld [vmem:[%s253 + $0x6c] sm:$0xf]
      %v396 = vld [vmem:[%s253 + $0x70] sm:$0xf]
      %v397 = vld [vmem:[%s253 + $0x74] sm:$0xf]
      %v398 = vld [vmem:[%s253 + $0x78] sm:$0xf]
      %v399 = vld [vmem:[%s253 + $0x7c] sm:$0xf]
      %v432 = vunpack.c.l.b16 %v336
      %v433 = vunpack.c.h.b16 %v336
      %v434 = vunpack.c.l.b16 %v337
      %v435 = vunpack.c.h.b16 %v337
      %v436 = vunpack.c.l.b16 %v338
      %v437 = vunpack.c.h.b16 %v338
      %v438 = vunpack.c.l.b16 %v339
      %v439 = vunpack.c.h.b16 %v339
      %v440 = vunpack.c.l.b16 %v340
      %v441 = vunpack.c.h.b16 %v340
      %v442 = vunpack.c.l.b16 %v341
      %v443 = vunpack.c.h.b16 %v341
      %v444 = vunpack.c.l.b16 %v342
      %v445 = vunpack.c.h.b16 %v342
      %v446 = vunpack.c.l.b16 %v343
      %v447 = vunpack.c.h.b16 %v343
      %v448 = vunpack.c.l.b16 %v344
      %v449 = vunpack.c.h.b16 %v344
      %v450 = vunpack.c.l.b16 %v345
      %v451 = vunpack.c.h.b16 %v345
      %v452 = vunpack.c.l.b16 %v346
      %v453 = vunpack.c.h.b16 %v346
      %v454 = vunpack.c.l.b16 %v347
      %v455 = vunpack.c.h.b16 %v347
      %v456 = vunpack.c.l.b16 %v348
      %v457 = vunpack.c.h.b16 %v348
      %v458 = vunpack.c.l.b16 %v349
      %v459 = vunpack.c.h.b16 %v349
      %v460 = vunpack.c.l.b16 %v350
      %v461 = vunpack.c.h.b16 %v350
      %v462 = vunpack.c.l.b16 %v351
      %v463 = vunpack.c.h.b16 %v351
      %v464 = vunpack.c.l.b16 %v352
      %v465 = vunpack.c.h.b16 %v352
      %v466 = vunpack.c.l.b16 %v353
      %v467 = vunpack.c.h.b16 %v353
      %v468 = vunpack.c.l.b16 %v354
      %v469 = vunpack.c.h.b16 %v354
      %v470 = vunpack.c.l.b16 %v355
      %v471 = vunpack.c.h.b16 %v355
      %v472 = vunpack.c.l.b16 %v356
      %v473 = vunpack.c.h.b16 %v356
      %v474 = vunpack.c.l.b16 %v357
      %v475 = vunpack.c.h.b16 %v357
      %v476 = vunpack.c.l.b16 %v358
      %v477 = vunpack.c.h.b16 %v358
      %v478 = vunpack.c.l.b16 %v359
      %v479 = vunpack.c.h.b16 %v359
      %v480 = vunpack.c.l.b16 %v360
      %v481 = vunpack.c.h.b16 %v360
      %v482 = vunpack.c.l.b16 %v361
      %v483 = vunpack.c.h.b16 %v361
      %v484 = vunpack.c.l.b16 %v362
      %v485 = vunpack.c.h.b16 %v362
      %v486 = vunpack.c.l.b16 %v363
      %v487 = vunpack.c.h.b16 %v363
      %v488 = vunpack.c.l.b16 %v364
      %v489 = vunpack.c.h.b16 %v364
      %v490 = vunpack.c.l.b16 %v365
      %v491 = vunpack.c.h.b16 %v365
      %v492 = vunpack.c.l.b16 %v366
      %v493 = vunpack.c.h.b16 %v366
      %v494 = vunpack.c.l.b16 %v367
      %v495 = vunpack.c.h.b16 %v367
      %v496 = vpack.c.b16 %v434, %v432
      %v497 = vpack.c.b16 %v435, %v433
      %v498 = vpack.c.b16 %v438, %v436
      %v499 = vpack.c.b16 %v439, %v437
      %v500 = vpack.c.b16 %v442, %v440
      %v501 = vpack.c.b16 %v443, %v441
      %v502 = vpack.c.b16 %v446, %v444
      %v503 = vpack.c.b16 %v447, %v445
      %v504 = vpack.c.b16 %v450, %v448
      %v505 = vpack.c.b16 %v451, %v449
      %v506 = vpack.c.b16 %v454, %v452
      %v507 = vpack.c.b16 %v455, %v453
      %v508 = vpack.c.b16 %v458, %v456
      %v509 = vpack.c.b16 %v459, %v457
      %v510 = vpack.c.b16 %v462, %v460
      %v511 = vpack.c.b16 %v463, %v461
      %v512 = vpack.c.b16 %v466, %v464
      %v513 = vpack.c.b16 %v467, %v465
      %v514 = vpack.c.b16 %v470, %v468
      %v515 = vpack.c.b16 %v471, %v469
      %v516 = vpack.c.b16 %v474, %v472
      %v517 = vpack.c.b16 %v475, %v473
      %v518 = vpack.c.b16 %v478, %v476
      %v519 = vpack.c.b16 %v479, %v477
      %v520 = vpack.c.b16 %v482, %v480
      %v521 = vpack.c.b16 %v483, %v481
      %v522 = vpack.c.b16 %v486, %v484
      %v523 = vpack.c.b16 %v487, %v485
      %v524 = vpack.c.b16 %v490, %v488
      %v525 = vpack.c.b16 %v491, %v489
      %v526 = vpack.c.b16 %v494, %v492
      %v527 = vpack.c.b16 %v495, %v493
      %v592 = vunpack.c.l.b16 %v368
      %v593 = vunpack.c.l.b16 %v369
      %v594 = vunpack.c.l.b16 %v370
      %v595 = vunpack.c.l.b16 %v371
      %v596 = vunpack.c.l.b16 %v372
      %v597 = vunpack.c.l.b16 %v373
      %v598 = vunpack.c.l.b16 %v374
      %v599 = vunpack.c.l.b16 %v375
      %v600 = vunpack.c.l.b16 %v376
      %v601 = vunpack.c.l.b16 %v377
      %v602 = vunpack.c.l.b16 %v378
      %v603 = vunpack.c.l.b16 %v379
      %v604 = vunpack.c.l.b16 %v380
      %v605 = vunpack.c.l.b16 %v381
      %v606 = vunpack.c.l.b16 %v382
      %v607 = vunpack.c.l.b16 %v383
      %v608 = vunpack.c.l.b16 %v384
      %v609 = vunpack.c.l.b16 %v385
      %v610 = vunpack.c.l.b16 %v386
      %v611 = vunpack.c.l.b16 %v387
      %v612 = vunpack.c.l.b16 %v388
      %v613 = vunpack.c.l.b16 %v389
      %v614 = vunpack.c.l.b16 %v390
      %v615 = vunpack.c.l.b16 %v391
      %v616 = vunpack.c.l.b16 %v392
      %v617 = vunpack.c.l.b16 %v393
      %v618 = vunpack.c.l.b16 %v394
      %v619 = vunpack.c.l.b16 %v395
      %v620 = vunpack.c.l.b16 %v396
      %v621 = vunpack.c.l.b16 %v397
      %v622 = vunpack.c.l.b16 %v398
      %v623 = vunpack.c.l.b16 %v399
      %v624 = vpack.c.b16 %v593, %v592
      %v625 = vpack.c.b16 %v595, %v594
      %v626 = vpack.c.b16 %v597, %v596
      %v627 = vpack.c.b16 %v599, %v598
      %v628 = vpack.c.b16 %v601, %v600
      %v629 = vpack.c.b16 %v603, %v602
      %v630 = vpack.c.b16 %v605, %v604
      %v631 = vpack.c.b16 %v607, %v606
      %v632 = vpack.c.b16 %v609, %v608
      %v633 = vpack.c.b16 %v611, %v610
      %v634 = vpack.c.b16 %v613, %v612
      %v635 = vpack.c.b16 %v615, %v614
      %v636 = vpack.c.b16 %v617, %v616
      %v637 = vpack.c.b16 %v619, %v618
      %v638 = vpack.c.b16 %v621, %v620
      %v639 = vpack.c.b16 %v623, %v622
      %656 = vmatprep.subr.bf16.mxu0 0
      %657 = vmatpush1.bf16.msra.mxu0 %v624
      %658 = vmatprep.subr.bf16.mxu0 0
      %659 = vmatpush1.bf16.msra.mxu0 %v625
      %660 = vmatprep.subr.bf16.mxu0 0
      %661 = vmatpush1.bf16.msra.mxu0 %v626
      %662 = vmatprep.subr.bf16.mxu0 0
      %663 = vmatpush1.bf16.msra.mxu0 %v627
      %664 = vmatprep.subr.bf16.mxu0 0
      %665 = vmatpush1.bf16.msra.mxu0 %v628
      %666 = vmatprep.subr.bf16.mxu0 0
      %667 = vmatpush1.bf16.msra.mxu0 %v629
      %668 = vmatprep.subr.bf16.mxu0 0
      %669 = vmatpush1.bf16.msra.mxu0 %v630
      %670 = vmatprep.subr.bf16.mxu0 0
      %671 = vmatpush1.bf16.msra.mxu0 %v631
      %672 = vmatprep.subr.bf16.mxu0 0
      %673 = vmatpush1.bf16.msra.mxu0 %v632
      %674 = vmatprep.subr.bf16.mxu0 0
      %675 = vmatpush1.bf16.msra.mxu0 %v633
      %676 = vmatprep.subr.bf16.mxu0 0
      %677 = vmatpush1.bf16.msra.mxu0 %v634
      %678 = vmatprep.subr.bf16.mxu0 0
      %679 = vmatpush1.bf16.msra.mxu0 %v635
      %680 = vmatprep.subr.bf16.mxu0 0
      %681 = vmatpush1.bf16.msra.mxu0 %v636
      %682 = vmatprep.subr.bf16.mxu0 0
      %683 = vmatpush1.bf16.msra.mxu0 %v637
      %684 = vmatprep.subr.bf16.mxu0 0
      %685 = vmatpush1.bf16.msra.mxu0 %v638
      %686 = vmatprep.subr.bf16.mxu0 0
      %687 = vmatpush1.bf16.msra.mxu0 %v639
      %688 = vmatprep.mubr.bf16.mxu0 %v497
      %689 = vmatmul.mubr.bf16.gmra.mrb[0].mxu0 %v496
      %v690 = vpop.f32.mrb[0].mxu0
      %v691 = vadd.f32 0.0, %v690
      %v692 = vpop.f32.mrb[0].mxu0
      %v693 = vpop.f32.mrb[0].mxu0
      %v694 = vadd.f32 0.0, %v693
      %v695 = vpop.f32.mrb[0].mxu0
      %696 = vmatprep.mubr.bf16.mxu0 %v499
      %697 = vmatmul.mubr.bf16.gmra.mrb[0].mxu0 %v498
      %v698 = vpop.f32.mrb[0].mxu0
      %v699 = vadd.f32 0.0, %v698
      %v700 = vpop.f32.mrb[0].mxu0
      %v701 = vpop.f32.mrb[0].mxu0
      %v702 = vadd.f32 0.0, %v701
      %v703 = vpop.f32.mrb[0].mxu0
      %704 = vmatprep.mubr.bf16.mxu0 %v501
      %705 = vmatmul.mubr.bf16.gmra.mrb[0].mxu0 %v500
      %v706 = vpop.f32.mrb[0].mxu0
      %v707 = vadd.f32 0.0, %v706
      %v708 = vpop.f32.mrb[0].mxu0
      %v709 = vpop.f32.mrb[0].mxu0
      %v710 = vadd.f32 0.0, %v709
      %v711 = vpop.f32.mrb[0].mxu0
      %712 = vmatprep.mubr.bf16.mxu0 %v503
      %713 = vmatmul.mubr.bf16.gmra.mrb[0].mxu0 %v502
      %v714 = vpop.f32.mrb[0].mxu0
      %v715 = vadd.f32 0.0, %v714
      %v716 = vpop.f32.mrb[0].mxu0
      %v717 = vpop.f32.mrb[0].mxu0
      %v718 = vadd.f32 0.0, %v717
      %v719 = vpop.f32.mrb[0].mxu0
      %720 = vmatprep.mubr.bf16.mxu0 %v505
      %721 = vmatmul.mubr.bf16.gmra.mrb[0].mxu0 %v504
      %v722 = vpop.f32.mrb[0].mxu0
      %v723 = vadd.f32 0.0, %v722
      %v724 = vpop.f32.mrb[0].mxu0
      %v725 = vpop.f32.mrb[0].mxu0
      %v726 = vadd.f32 0.0, %v725
      %v727 = vpop.f32.mrb[0].mxu0
      %728 = vmatprep.mubr.bf16.mxu0 %v507
      %729 = vmatmul.mubr.bf16.gmra.mrb[0].mxu0 %v506
      %v730 = vpop.f32.mrb[0].mxu0
      %v731 = vadd.f32 0.0, %v730
      %v732 = vpop.f32.mrb[0].mxu0
      %v733 = vpop.f32.mrb[0].mxu0
      %v734 = vadd.f32 0.0, %v733
      %v735 = vpop.f32.mrb[0].mxu0
      %736 = vmatprep.mubr.bf16.mxu0 %v509
      %737 = vmatmul.mubr.bf16.gmra.mrb[0].mxu0 %v508
      %v738 = vpop.f32.mrb[0].mxu0
      %v739 = vadd.f32 0.0, %v738
      %v740 = vpop.f32.mrb[0].mxu0
      %v741 = vpop.f32.mrb[0].mxu0
      %v742 = vadd.f32 0.0, %v741
      %v743 = vpop.f32.mrb[0].mxu0
      %744 = vmatprep.mubr.bf16.mxu0 %v511
      %745 = vmatmul.mubr.bf16.gmra.mrb[0].mxu0 %v510
      %v746 = vpop.f32.mrb[0].mxu0
      %v747 = vadd.f32 0.0, %v746
      %v748 = vpop.f32.mrb[0].mxu0
      %v749 = vpop.f32.mrb[0].mxu0
      %v750 = vadd.f32 0.0, %v749
      %v751 = vpop.f32.mrb[0].mxu0
      %752 = vmatprep.mubr.bf16.mxu0 %v513
      %753 = vmatmul.mubr.bf16.gmra.mrb[0].mxu0 %v512
      %v754 = vpop.f32.mrb[0].mxu0
      %v755 = vadd.f32 0.0, %v754
      %v756 = vpop.f32.mrb[0].mxu0
      %v757 = vpop.f32.mrb[0].mxu0
      %v758 = vadd.f32 0.0, %v757
      %v759 = vpop.f32.mrb[0].mxu0
      %760 = vmatprep.mubr.bf16.mxu0 %v515
      %761 = vmatmul.mubr.bf16.gmra.mrb[0].mxu0 %v514
      %v762 = vpop.f32.mrb[0].mxu0
      %v763 = vadd.f32 0.0, %v762
      %v764 = vpop.f32.mrb[0].mxu0
      %v765 = vpop.f32.mrb[0].mxu0
      %v766 = vadd.f32 0.0, %v765
      %v767 = vpop.f32.mrb[0].mxu0
      %768 = vmatprep.mubr.bf16.mxu0 %v517
      %769 = vmatmul.mubr.bf16.gmra.mrb[0].mxu0 %v516
      %v770 = vpop.f32.mrb[0].mxu0
      %v771 = vadd.f32 0.0, %v770
      %v772 = vpop.f32.mrb[0].mxu0
      %v773 = vpop.f32.mrb[0].mxu0
      %v774 = vadd.f32 0.0, %v773
      %v775 = vpop.f32.mrb[0].mxu0
      %776 = vmatprep.mubr.bf16.mxu0 %v519
      %777 = vmatmul.mubr.bf16.gmra.mrb[0].mxu0 %v518
      %v778 = vpop.f32.mrb[0].mxu0
      %v779 = vadd.f32 0.0, %v778
      %v780 = vpop.f32.mrb[0].mxu0
      %v781 = vpop.f32.mrb[0].mxu0
      %v782 = vadd.f32 0.0, %v781
      %v783 = vpop.f32.mrb[0].mxu0
      %784 = vmatprep.mubr.bf16.mxu0 %v521
      %785 = vmatmul.mubr.bf16.gmra.mrb[0].mxu0 %v520
      %v786 = vpop.f32.mrb[0].mxu0
      %v787 = vadd.f32 0.0, %v786
      %v788 = vpop.f32.mrb[0].mxu0
      %v789 = vpop.f32.mrb[0].mxu0
      %v790 = vadd.f32 0.0, %v789
      %v791 = vpop.f32.mrb[0].mxu0
      %792 = vmatprep.mubr.bf16.mxu0 %v523
      %793 = vmatmul.mubr.bf16.gmra.mrb[0].mxu0 %v522
      %v794 = vpop.f32.mrb[0].mxu0
      %v795 = vadd.f32 0.0, %v794
      %v796 = vpop.f32.mrb[0].mxu0
      %v797 = vpop.f32.mrb[0].mxu0
      %v798 = vadd.f32 0.0, %v797
      %v799 = vpop.f32.mrb[0].mxu0
      %800 = vmatprep.mubr.bf16.mxu0 %v525
      %801 = vmatmul.mubr.bf16.gmra.mrb[0].mxu0 %v524
      %v802 = vpop.f32.mrb[0].mxu0
      %v803 = vadd.f32 0.0, %v802
      %v804 = vpop.f32.mrb[0].mxu0
      %v805 = vpop.f32.mrb[0].mxu0
      %v806 = vadd.f32 0.0, %v805
      %v807 = vpop.f32.mrb[0].mxu0
      %808 = vmatprep.mubr.bf16.mxu0 %v527
      %809 = vmatmul.mubr.bf16.gmra.mrb[0].mxu0 %v526
      %v810 = vpop.f32.mrb[0].mxu0
      %v811 = vadd.f32 0.0, %v810
      %v812 = vpop.f32.mrb[0].mxu0
      %v813 = vpop.f32.mrb[0].mxu0
      %v814 = vadd.f32 0.0, %v813
      %v815 = vpop.f32.mrb[0].mxu0
      %816 = vdwg.mxu0
      %v817 = vadd.f32 %v304, %v691
      %v818 = vadd.f32 %v305, %v694
      %v819 = vadd.f32 %v306, %v699
      %v820 = vadd.f32 %v307, %v702
      %v821 = vadd.f32 %v308, %v707
      %v822 = vadd.f32 %v309, %v710
      %v823 = vadd.f32 %v310, %v715
      %v824 = vadd.f32 %v311, %v718
      %v825 = vadd.f32 %v312, %v723
      %v826 = vadd.f32 %v313, %v726
      %v827 = vadd.f32 %v314, %v731
      %v828 = vadd.f32 %v315, %v734
      %v829 = vadd.f32 %v316, %v739
      %v830 = vadd.f32 %v317, %v742
      %v831 = vadd.f32 %v318, %v747
      %v832 = vadd.f32 %v319, %v750
      %v833 = vadd.f32 %v320, %v755
      %v834 = vadd.f32 %v321, %v758
      %v835 = vadd.f32 %v322, %v763
      %v836 = vadd.f32 %v323, %v766
      %v837 = vadd.f32 %v324, %v771
      %v838 = vadd.f32 %v325, %v774
      %v839 = vadd.f32 %v326, %v779
      %v840 = vadd.f32 %v327, %v782
      %v841 = vadd.f32 %v328, %v787
      %v842 = vadd.f32 %v329, %v790
      %v843 = vadd.f32 %v330, %v795
      %v844 = vadd.f32 %v331, %v798
      %v845 = vadd.f32 %v332, %v803
      %v846 = vadd.f32 %v333, %v806
      %v847 = vadd.f32 %v334, %v811
      %v848 = vadd.f32 %v335, %v814
      %849 = vst [vmem:[#allocation2] sm:$0xff] %v817
      %850 = vst [vmem:[#allocation2 + $0x8] sm:$0xff] %v818
      %851 = vst [vmem:[#allocation2 + $0x10] sm:$0xff] %v819
      %852 = vst [vmem:[#allocation2 + $0x18] sm:$0xff] %v820
      %853 = vst [vmem:[#allocation2 + $0x20] sm:$0xff] %v821
      %854 = vst [vmem:[#allocation2 + $0x28] sm:$0xff] %v822
      %855 = vst [vmem:[#allocation2 + $0x30] sm:$0xff] %v823
      %856 = vst [vmem:[#allocation2 + $0x38] sm:$0xff] %v824
      %857 = vst [vmem:[#allocation2 + $0x40] sm:$0xff] %v825
      %858 = vst [vmem:[#allocation2 + $0x48] sm:$0xff] %v826
      %859 = vst [vmem:[#allocation2 + $0x50] sm:$0xff] %v827
      %860 = vst [vmem:[#allocation2 + $0x58] sm:$0xff] %v828
      %861 = vst [vmem:[#allocation2 + $0x60] sm:$0xff] %v829
      %862 = vst [vmem:[#allocation2 + $0x68] sm:$0xff] %v830
      %863 = vst [vmem:[#allocation2 + $0x70] sm:$0xff] %v831
      %864 = vst [vmem:[#allocation2 + $0x78] sm:$0xff] %v832
      %865 = vst [vmem:[#allocation2 + $0x80] sm:$0xff] %v833
      %866 = vst [vmem:[#allocation2 + $0x88] sm:$0xff] %v834
      %867 = vst [vmem:[#allocation2 + $0x90] sm:$0xff] %v835
      %868 = vst [vmem:[#allocation2 + $0x98] sm:$0xff] %v836
      %869 = vst [vmem:[#allocation2 + $0xa0] sm:$0xff] %v837
      %870 = vst [vmem:[#allocation2 + $0xa8] sm:$0xff] %v838
      %871 = vst [vmem:[#allocation2 + $0xb0] sm:$0xff] %v839
      %872 = vst [vmem:[#allocation2 + $0xb8] sm:$0xff] %v840
      %873 = vst [vmem:[#allocation2 + $0xc0] sm:$0xff] %v841
      %874 = vst [vmem:[#allocation2 + $0xc8] sm:$0xff] %v842
      %875 = vst [vmem:[#allocation2 + $0xd0] sm:$0xff] %v843
      %876 = vst [vmem:[#allocation2 + $0xd8] sm:$0xff] %v844
      %877 = vst [vmem:[#allocation2 + $0xe0] sm:$0xff] %v845
      %878 = vst [vmem:[#allocation2 + $0xe8] sm:$0xff] %v846
      %879 = vst [vmem:[#allocation2 + $0xf0] sm:$0xff] %v847
      %880 = vst [vmem:[#allocation2 + $0xf8] sm:$0xff] %v848
      // Predicated region
      $region37: #{stem_fn.1} parent=31 // pred_check
        %p881 = pneg %p268
      $region38: #{stem_fn.1} parent=31 // pred_check_branch
        %883 = sbr.rel (%p881) target = $region40
      $region39: #{stem_fn.1} parent=31 // pred_region
        %v884 = vld [vmem:[#allocation2] sm:$0xff]
        %v885 = vld [vmem:[#allocation2 + $0x8] sm:$0xff]
        %v886 = vld [vmem:[#allocation2 + $0x10] sm:$0xff]
        %v887 = vld [vmem:[#allocation2 + $0x18] sm:$0xff]
        %v888 = vld [vmem:[#allocation2 + $0x20] sm:$0xff]
        %v889 = vld [vmem:[#allocation2 + $0x28] sm:$0xff]
        %v890 = vld [vmem:[#allocation2 + $0x30] sm:$0xff]
        %v891 = vld [vmem:[#allocation2 + $0x38] sm:$0xff]
        %v892 = vld [vmem:[#allocation2 + $0x40] sm:$0xff]
        %v893 = vld [vmem:[#allocation2 + $0x48] sm:$0xff]
        %v894 = vld [vmem:[#allocation2 + $0x50] sm:$0xff]
        %v895 = vld [vmem:[#allocation2 + $0x58] sm:$0xff]
        %v896 = vld [vmem:[#allocation2 + $0x60] sm:$0xff]
        %v897 = vld [vmem:[#allocation2 + $0x68] sm:$0xff]
        %v898 = vld [vmem:[#allocation2 + $0x70] sm:$0xff]
        %v899 = vld [vmem:[#allocation2 + $0x78] sm:$0xff]
        %v900 = vld [vmem:[#allocation2 + $0x80] sm:$0xff]
        %v901 = vld [vmem:[#allocation2 + $0x88] sm:$0xff]
        %v902 = vld [vmem:[#allocation2 + $0x90] sm:$0xff]
        %v903 = vld [vmem:[#allocation2 + $0x98] sm:$0xff]
        %v904 = vld [vmem:[#allocation2 + $0xa0] sm:$0xff]
        %v905 = vld [vmem:[#allocation2 + $0xa8] sm:$0xff]
        %v906 = vld [vmem:[#allocation2 + $0xb0] sm:$0xff]
        %v907 = vld [vmem:[#allocation2 + $0xb8] sm:$0xff]
        %v908 = vld [vmem:[#allocation2 + $0xc0] sm:$0xff]
        %v909 = vld [vmem:[#allocation2 + $0xc8] sm:$0xff]
        %v910 = vld [vmem:[#allocation2 + $0xd0] sm:$0xff]
        %v911 = vld [vmem:[#allocation2 + $0xd8] sm:$0xff]
        %v912 = vld [vmem:[#allocation2 + $0xe0] sm:$0xff]
        %v913 = vld [vmem:[#allocation2 + $0xe8] sm:$0xff]
        %v914 = vld [vmem:[#allocation2 + $0xf0] sm:$0xff]
        %v915 = vld [vmem:[#allocation2 + $0xf8] sm:$0xff]
        %v916 = vld [vmem:[%s257] sm:$0x1]
        %v918 = vlaneseq
        %v919 = vshrl.u32 %v918, 7
        %v920 = vsub.s32 0, %v919
        %v921 = vrot.slane %v916, %v920
        %v923 = vadd.f32 %v884, %v921
        %v924 = vadd.f32 %v885, %v921
        %v925 = vadd.f32 %v886, %v921
        %v926 = vadd.f32 %v887, %v921
        %v927 = vadd.f32 %v888, %v921
        %v928 = vadd.f32 %v889, %v921
        %v929 = vadd.f32 %v890, %v921
        %v930 = vadd.f32 %v891, %v921
        %v931 = vadd.f32 %v892, %v921
        %v932 = vadd.f32 %v893, %v921
        %v933 = vadd.f32 %v894, %v921
        %v934 = vadd.f32 %v895, %v921
        %v935 = vadd.f32 %v896, %v921
        %v936 = vadd.f32 %v897, %v921
        %v937 = vadd.f32 %v898, %v921
        %v938 = vadd.f32 %v899, %v921
        %v939 = vadd.f32 %v900, %v921
        %v940 = vadd.f32 %v901, %v921
        %v941 = vadd.f32 %v902, %v921
        %v942 = vadd.f32 %v903, %v921
        %v943 = vadd.f32 %v904, %v921
        %v944 = vadd.f32 %v905, %v921
        %v945 = vadd.f32 %v906, %v921
        %v946 = vadd.f32 %v907, %v921
        %v947 = vadd.f32 %v908, %v921
        %v948 = vadd.f32 %v909, %v921
        %v949 = vadd.f32 %v910, %v921
        %v950 = vadd.f32 %v911, %v921
        %v951 = vadd.f32 %v912, %v921
        %v952 = vadd.f32 %v913, %v921
        %v953 = vadd.f32 %v914, %v921
        %v954 = vadd.f32 %v915, %v921
        %v955 = vpack.c.bf16 %v924, %v923
        %v956 = vpack.c.bf16 %v926, %v925
        %v957 = vpack.c.bf16 %v928, %v927
        %v958 = vpack.c.bf16 %v930, %v929
        %v959 = vpack.c.bf16 %v932, %v931
        %v960 = vpack.c.bf16 %v934, %v933
        %v961 = vpack.c.bf16 %v936, %v935
        %v962 = vpack.c.bf16 %v938, %v937
        %v963 = vpack.c.bf16 %v940, %v939
        %v964 = vpack.c.bf16 %v942, %v941
        %v965 = vpack.c.bf16 %v944, %v943
        %v966 = vpack.c.bf16 %v946, %v945
        %v967 = vpack.c.bf16 %v948, %v947
        %v968 = vpack.c.bf16 %v950, %v949
        %v969 = vpack.c.bf16 %v952, %v951
        %v970 = vpack.c.bf16 %v954, %v953
        %v987 = vunpack.c.l.b16 %v955
        %v988 = vunpack.c.h.b16 %v955
        %v989 = vunpack.c.l.b16 %v956
        %v990 = vunpack.c.h.b16 %v956
        %v991 = vunpack.c.l.b16 %v957
        %v992 = vunpack.c.h.b16 %v957
        %v993 = vunpack.c.l.b16 %v958
        %v994 = vunpack.c.h.b16 %v958
        %v995 = vunpack.c.l.b16 %v959
        %v996 = vunpack.c.h.b16 %v959
        %v997 = vunpack.c.l.b16 %v960
        %v998 = vunpack.c.h.b16 %v960
        %v999 = vunpack.c.l.b16 %v961
        %v1000 = vunpack.c.h.b16 %v961
        %v1001 = vunpack.c.l.b16 %v962
        %v1002 = vunpack.c.h.b16 %v962
        %v1003 = vunpack.c.l.b16 %v963
        %v1004 = vunpack.c.h.b16 %v963
        %v1005 = vunpack.c.l.b16 %v964
        %v1006 = vunpack.c.h.b16 %v964
        %v1007 = vunpack.c.l.b16 %v965
        %v1008 = vunpack.c.h.b16 %v965
        %v1009 = vunpack.c.l.b16 %v966
        %v1010 = vunpack.c.h.b16 %v966
        %v1011 = vunpack.c.l.b16 %v967
        %v1012 = vunpack.c.h.b16 %v967
        %v1013 = vunpack.c.l.b16 %v968
        %v1014 = vunpack.c.h.b16 %v968
        %v1015 = vunpack.c.l.b16 %v969
        %v1016 = vunpack.c.h.b16 %v969
        %v1017 = vunpack.c.l.b16 %v970
        %v1018 = vunpack.c.h.b16 %v970
        %v1019 = vpack.c.b16 %v987, %v987
        %v1020 = vpack.c.b16 %v988, %v988
        %v1021 = vpack.c.b16 %v989, %v989
        %v1022 = vpack.c.b16 %v990, %v990
        %v1023 = vpack.c.b16 %v991, %v991
        %v1024 = vpack.c.b16 %v992, %v992
        %v1025 = vpack.c.b16 %v993, %v993
        %v1026 = vpack.c.b16 %v994, %v994
        %v1027 = vpack.c.b16 %v995, %v995
        %v1028 = vpack.c.b16 %v996, %v996
        %v1029 = vpack.c.b16 %v997, %v997
        %v1030 = vpack.c.b16 %v998, %v998
        %v1031 = vpack.c.b16 %v999, %v999
        %v1032 = vpack.c.b16 %v1000, %v1000
        %v1033 = vpack.c.b16 %v1001, %v1001
        %v1034 = vpack.c.b16 %v1002, %v1002
        %v1035 = vpack.c.b16 %v1003, %v1003
        %v1036 = vpack.c.b16 %v1004, %v1004
        %v1037 = vpack.c.b16 %v1005, %v1005
        %v1038 = vpack.c.b16 %v1006, %v1006
        %v1039 = vpack.c.b16 %v1007, %v1007
        %v1040 = vpack.c.b16 %v1008, %v1008
        %v1041 = vpack.c.b16 %v1009, %v1009
        %v1042 = vpack.c.b16 %v1010, %v1010
        %v1043 = vpack.c.b16 %v1011, %v1011
        %v1044 = vpack.c.b16 %v1012, %v1012
        %v1045 = vpack.c.b16 %v1013, %v1013
        %v1046 = vpack.c.b16 %v1014, %v1014
        %v1047 = vpack.c.b16 %v1015, %v1015
        %v1048 = vpack.c.b16 %v1016, %v1016
        %v1049 = vpack.c.b16 %v1017, %v1017
        %v1050 = vpack.c.b16 %v1018, %v1018
        %1083 = vst [vmem:[%s265] sm:$0xf] %v1019
        %1084 = vst [vmem:[%s265 + $0x4] sm:$0xf] %v1020
        %1085 = vst [vmem:[%s265 + $0x8] sm:$0xf] %v1021
        %1086 = vst [vmem:[%s265 + $0xc] sm:$0xf] %v1022
        %1087 = vst [vmem:[%s265 + $0x10] sm:$0xf] %v1023
        %1088 = vst [vmem:[%s265 + $0x14] sm:$0xf] %v1024
        %1089 = vst [vmem:[%s265 + $0x18] sm:$0xf] %v1025
        %1090 = vst [vmem:[%s265 + $0x1c] sm:$0xf] %v1026
        %1091 = vst [vmem:[%s265 + $0x20] sm:$0xf] %v1027
        %1092 = vst [vmem:[%s265 + $0x24] sm:$0xf] %v1028
        %1093 = vst [vmem:[%s265 + $0x28] sm:$0xf] %v1029
        %1094 = vst [vmem:[%s265 + $0x2c] sm:$0xf] %v1030
        %1095 = vst [vmem:[%s265 + $0x30] sm:$0xf] %v1031
        %1096 = vst [vmem:[%s265 + $0x34] sm:$0xf] %v1032
        %1097 = vst [vmem:[%s265 + $0x38] sm:$0xf] %v1033
        %1098 = vst [vmem:[%s265 + $0x3c] sm:$0xf] %v1034
        %1099 = vst [vmem:[%s265 + $0x40] sm:$0xf] %v1035
        %1100 = vst [vmem:[%s265 + $0x44] sm:$0xf] %v1036
        %1101 = vst [vmem:[%s265 + $0x48] sm:$0xf] %v1037
        %1102 = vst [vmem:[%s265 + $0x4c] sm:$0xf] %v1038
        %1103 = vst [vmem:[%s265 + $0x50] sm:$0xf] %v1039
        %1104 = vst [vmem:[%s265 + $0x54] sm:$0xf] %v1040
        %1105 = vst [vmem:[%s265 + $0x58] sm:$0xf] %v1041
        %1106 = vst [vmem:[%s265 + $0x5c] sm:$0xf] %v1042
        %1107 = vst [vmem:[%s265 + $0x60] sm:$0xf] %v1043
        %1108 = vst [vmem:[%s265 + $0x64] sm:$0xf] %v1044
        %1109 = vst [vmem:[%s265 + $0x68] sm:$0xf] %v1045
        %1110 = vst [vmem:[%s265 + $0x6c] sm:$0xf] %v1046
        %1111 = vst [vmem:[%s265 + $0x70] sm:$0xf] %v1047
        %1112 = vst [vmem:[%s265 + $0x74] sm:$0xf] %v1048
        %1113 = vst [vmem:[%s265 + $0x78] sm:$0xf] %v1049
        %1114 = vst [vmem:[%s265 + $0x7c] sm:$0xf] %v1050
      $region40: #{stem_fn.1} parent=31 // pred_fallthru
        _
      %s1115 = smul.u32 32, %s19
      %p1116 = scmp.lt.s32.totalorder %s1115, 255
      %s1117 = scalar_select %p1116, %s1115, 255
      %p1118 = scmp.lt.s32.totalorder %s20, 0
      %s1119 = scalar_select %p1118, %s20, 0
      %s1120 = sadd.s32 %s1119, %s1117
      %s1121 = smul.addr %s1120, 4
      %s1122 = scalar_lea.vmem %s3, %s1121
      // Predicated region
      $region41: #{stem_fn.1} parent=31 // pred_check
        %p1123 = pneg %p135
      $region42: #{stem_fn.1} parent=31 // pred_check_branch
        %1125 = sbr.rel (%p1123) target = $region44
      $region43: #{stem_fn.1} parent=31 // pred_region
        %s1126 = smul.u32 32, %s19
      $region44: #{stem_fn.1} parent=31 // pred_fallthru
        _
    $region32: #{stem_fn.1} parent=5 // pred_fallthru
      _
    %p1127 = scmp.le.s32.totalorder 2, %s9
    // Predicated region
    $region45: #{stem_fn.1} parent=5 // pred_check
      %p1128 = pneg %p1127
    $region46: #{stem_fn.1} parent=5 // pred_check_branch
      %1130 = sbr.rel (%p1128) target = $region48
    $region47: #{stem_fn.1} parent=5 // pred_region
      %s1131 = ssub.s32 %s9, 2
      // Predicated region
      $region49: #{stem_fn.1} parent=47 // pred_check
        %p1132 = pneg %p141
      $region50: #{stem_fn.1} parent=47 // pred_check_branch
        %1134 = sbr.rel (%p1132) target = $region52
      $region51: #{stem_fn.1} parent=47 // pred_region
        %s1135 = smul.u32 32, %s22
        %p1136 = scmp.lt.s32.totalorder %s1135, 255
        %s1137 = scalar_select %p1136, %s1135, 255
        %p1138 = scmp.lt.s32.totalorder %s23, 0
        %s1139 = scalar_select %p1138, %s23, 0
        %s1140 = sadd.s32 %s1139, %s1137
        %s1141 = smul.addr %s1140, 4
        %s1142 = scalar_lea.vmem %s3, %s1141
      $region52: #{stem_fn.1} parent=47 // pred_fallthru
        _
    $region48: #{stem_fn.1} parent=5 // pred_fallthru
      _
  $region6: #{stem_fn.1} parent=0 // loop_footer
    %s13 = sadd.s32 1, %s9
  $region7: #{stem_fn.1} parent=0 // loop_footer_branch
    %8 = sbr.rel target = $region3
  $region8: #{stem_fn.1} parent=0 // loop_exit
    _

</llo_original>
